<compile_context>
chip_gen: v7x
topology: tpu7x:2x2x1
jax: 0.10.0
libtpu: 0.0.40
codegen_flags: <defaults>
</compile_context>

<pallas_src>
import functools
import math

import jax
import jax.numpy as jnp
from jax.experimental import pallas as pl
from jax.experimental.pallas import tpu as pltpu

_LOG2PI = math.log(2.0 * math.pi)


def _round_up(x, m):
    return (x + m - 1) // m * m


def _cdiv(a, b):
    return (a + b - 1) // b


# ----------------------------------------------------------------------------
# Kernel
# ----------------------------------------------------------------------------
def _policy_kernel(obs_ref, aux_ref, w0_ref, w1_ref, wout_ref, bias_ref, out_ref,
                   *, out_dim, sample):
    """Fused actor+critic forward on one batch tile.

    obs_ref : (bb, in_dim)       observations
    aux_ref : (bb, D)            eps ~ N(0,1) if sample else the provided action
    w0_ref  : (in_dim, h2p)      [w0 | w0v | 0]
    w1_ref  : (h2p, h2p)         block_diag(w1, w1v) zero-padded
    wout_ref: (h2p, OUT_W)       cols [0:D)=actor head, col D+1=value head, rest 0
    bias_ref: (8, h2p)           rows: 0=[b0|b0v], 1=[b1|b1v],
                                 2=[bo, nlp_const, bv, 0..] (output-column layout),
                                 3=std (cols [0:D)), 4=inv_std (cols [0:D))
    out_ref : (bb, OUT_W)        cols [0:D)=action, D=nlp, D+1=value
    """
    bias = bias_ref[...]
    b0 = bias[0:1, :]
    b1 = bias[1:2, :]
    out_w = out_ref.shape[1]
    bout = bias[2:3, :out_w]                                       # (1, OUT_W)

    # Shared (actor ++ critic) MLP: 3 MXU matmuls for both networks, lane-dense.
    obs = obs_ref[...]
    h = jnp.tanh(jnp.dot(obs, w0_ref[...], preferred_element_type=jnp.float32) + b0)
    h = jnp.tanh(jnp.dot(h, w1_ref[...], preferred_element_type=jnp.float32) + b1)
    y = jnp.dot(h, wout_ref[...], preferred_element_type=jnp.float32) + bout
    # y columns: [mean(0..D-1) | nlp_const(D) | value(D+1) | 0...]

    mean = y[:, :out_dim]                                          # (bb, D)
    nlp_base = y[:, out_dim:out_dim + 1]                           # (bb, 1) = nlp_const
    tail = y[:, out_dim + 1:]                                      # value + zero pad

    aux = aux_ref[...]                                             # eps or action
    if sample:
        std = bias[3:4, :out_dim]                                  # (1, D), precomputed
        action = mean + std * aux                                  # reparameterized sample
        quad = jnp.sum(aux * aux, axis=-1, keepdims=True)          # z == eps exactly
    else:
        inv_std = bias[4:5, :out_dim]                              # (1, D), precomputed
        action = aux
        z = (aux - mean) * inv_std
        quad = jnp.sum(z * z, axis=-1, keepdims=True)

    nlp = nlp_base + 0.5 * quad                                    # (bb, 1)

    # Single full-slab store: [action | nlp | value | pad]
    out_ref[...] = jnp.concatenate([action, nlp, tail], axis=-1)


# ----------------------------------------------------------------------------
# Param packing (done once, outside the kernel)
# ----------------------------------------------------------------------------
def pack_params(params):
    w0, b0 = params["w0"], params["b0"]
    w1, b1 = params["w1"], params["b1"]
    wo, bo = params["wo"], params["bo"]
    w0v, b0v = params["w0v"], params["b0v"]
    w1v, b1v = params["w1v"], params["b1v"]
    wv, bv = params["wv"], params["bv"]
    logvar = params["logvar"]

    in_dim, n = w0.shape
    d = wo.shape[1]
    h2 = 2 * n
    h2p = _round_up(h2, 128)            # lane-dense hidden width
    out_w = _round_up(d + 2, 8)         # action | nlp | value | pad
    nlp_col = d
    val_col = d + 1
    assert val_col < out_w

    w0p = jnp.zeros((in_dim, h2p), jnp.float32)
    w0p = w0p.at[:, :n].set(w0).at[:, n:h2].set(w0v)

    w1p = jnp.zeros((h2p, h2p), jnp.float32)
    w1p = w1p.at[:n, :n].set(w1).at[n:h2, n:h2].set(w1v)

    woutp = jnp.zeros((h2p, out_w), jnp.float32)
    woutp = woutp.at[:n, :d].set(wo).at[n:h2, val_col].set(wv[:, 0])

    sum_logvar = jnp.sum(logvar)
    nlp_const = 0.5 * (sum_logvar + d * _LOG2PI)
    entropy = 0.5 * d * (1.0 + _LOG2PI) + 0.5 * sum_logvar

    bias = jnp.zeros((8, h2p), jnp.float32)
    bias = bias.at[0, :h2].set(jnp.concatenate([b0[0], b0v[0]]))
    bias = bias.at[1, :h2].set(jnp.concatenate([b1[0], b1v[0]]))
    bias = bias.at[2, :d].set(bo[0]).at[2, nlp_col].set(nlp_const).at[2, val_col].set(bv[0, 0])
    bias = bias.at[3, :d].set(jnp.exp(0.5 * logvar[0]))     # std
    bias = bias.at[4, :d].set(jnp.exp(-0.5 * logvar[0]))    # inv_std

    return dict(w0p=w0p, w1p=w1p, woutp=woutp, bias=bias,
                entropy=entropy.astype(jnp.float32),
                in_dim=in_dim, n_neurons=n, out_dim=d, h2p=h2p, out_w=out_w)


# ----------------------------------------------------------------------------
# Batch tiling
# ----------------------------------------------------------------------------
def _choose_block(b, block_b, split_threshold=512):
    """Pick the batch block size.

    * tiny batches: one block, no padding beyond the 8-row sublane round-up.
    * batches > split_threshold: >=2 near-equal blocks (so the "parallel" grid
      axis feeds both v7x TensorCores), capped at ~block_b rows/block, with at
      most a few padded rows in the tail tile.
    """
    bpad8 = _round_up(b, 8)
    if bpad8 <= split_threshold:
        return bpad8
    n_blocks = max(2, _cdiv(bpad8, block_b))
    return _round_up(_cdiv(bpad8, n_blocks), 8)


# ----------------------------------------------------------------------------
# Wrapper
# ----------------------------------------------------------------------------
def actor_critic_forward(packed, obs, action=None, sample_key=None, block_b=4096):
    obs = obs.astype(jnp.float32)
    b = obs.shape[0]
    d = packed["out_dim"]
    in_dim = packed["in_dim"]
    h2p = packed["h2p"]
    out_w = packed["out_w"]

    sample = action is None
    if sample:
        assert sample_key is not None
        aux = jax.random.normal(sample_key, (b, d), dtype=jnp.float32)
    else:
        aux = action.astype(jnp.float32)

    bb = _choose_block(b, block_b)
    bpad = _round_up(b, bb)
    if bpad != b:
        # Only the small tail tile gets padded (at most bb-1, typically <= 8 rows).
        obs = jnp.pad(obs, ((0, bpad - b), (0, 0)))
        aux = jnp.pad(aux, ((0, bpad - b), (0, 0)))

    kernel = functools.partial(_policy_kernel, out_dim=d, sample=sample)

    out = pl.pallas_call(
        kernel,
        out_shape=jax.ShapeDtypeStruct((bpad, out_w), jnp.float32),
        grid=(bpad // bb,),
        in_specs=[
            pl.BlockSpec((bb, in_dim), lambda i: (i, 0)),
            pl.BlockSpec((bb, d), lambda i: (i, 0)),
            pl.BlockSpec((in_dim, h2p), lambda i: (0, 0)),   # weights resident
            pl.BlockSpec((h2p, h2p), lambda i: (0, 0)),
            pl.BlockSpec((h2p, out_w), lambda i: (0, 0)),
            pl.BlockSpec((8, h2p), lambda i: (0, 0)),
        ],
        out_specs=pl.BlockSpec((bb, out_w), lambda i: (i, 0)),
        compiler_params=pltpu.CompilerParams(dimension_semantics=("parallel",)),
    )(obs, aux, packed["w0p"], packed["w1p"], packed["woutp"], packed["bias"])

    out = out[:b]
    # match torch: action (B,D), neg_log_prob (B,), entropy (B,), value (B,)
    action_out = out[:, :d]
    nlp = out[:, d]
    value = out[:, d + 1]
    entropy = jnp.broadcast_to(packed["entropy"], (b,))
    return action_out, nlp, entropy, value


# ----------------------------------------------------------------------------
# Init + pure-JAX reference (for correctness check only)
# ----------------------------------------------------------------------------
def init_params(key, input_dim, output_dim, n_neurons):
    ks = jax.random.split(key, 6)

    def lin(k, fan_in, fan_out):
        kw, kb = jax.random.split(k)
        bound = 1.0 / math.sqrt(fan_in)
        w = jax.random.uniform(kw, (fan_in, fan_out), jnp.float32, -bound, bound)
        b = jax.random.uniform(kb, (1, fan_out), jnp.float32, -bound, bound)
        return w, b

    w0, b0 = lin(ks[0], input_dim, n_neurons)
    w1, b1 = lin(ks[1], n_neurons, n_neurons)
    wo, bo = lin(ks[2], n_neurons, output_dim)
    w0v, b0v = lin(ks[3], input_dim, n_neurons)
    w1v, b1v = lin(ks[4], n_neurons, n_neurons)
    wv, bv = lin(ks[5], n_neurons, 1)
    logvar = jnp.zeros((1, output_dim), jnp.float32)   # self.var init = zeros
    return dict(w0=w0, b0=b0, w1=w1, b1=b1, wo=wo, bo=bo,
                w0v=w0v, b0v=b0v, w1v=w1v, b1v=b1v, wv=wv, bv=bv,
                logvar=logvar)


def _reference_forward(params, obs, action=None, eps=None):
    hi = jax.lax.Precision.HIGHEST
    x = jnp.tanh(jnp.dot(obs, params["w0"], precision=hi) + params["b0"])
    x = jnp.tanh(jnp.dot(x, params["w1"], precision=hi) + params["b1"])
    mean = jnp.dot(x, params["wo"], precision=hi) + params["bo"]
    logvar = params["logvar"]
    std = jnp.exp(0.5 * logvar)
    var = jnp.exp(logvar)
    if action is None:
        action = mean + std * eps
    d = mean.shape[-1]
    diff = action - mean
    nlp = 0.5 * (jnp.sum(diff * diff / var, axis=-1) + jnp.sum(logvar) + d * _LOG2PI)
    ent = jnp.full((obs.shape[0],), 0.5 * d * (1.0 + _LOG2PI) + 0.5 * jnp.sum(logvar))
    xv = jnp.tanh(jnp.dot(obs, params["w0v"], precision=hi) + params["b0v"])
    xv = jnp.tanh(jnp.dot(xv, params["w1v"], precision=hi) + params["b1v"])
    val = (jnp.dot(xv, params["wv"], precision=hi) + params["bv"])[:, 0]
    return action, nlp, ent, val


if __name__ == "__main__":
    input_dim, output_dim, n_neurons, batch = 16, 6, 32, 8

    root = jax.random.PRNGKey(0)
    k_params, k_obs, k_sample, k_act, k_obs2, k_act2 = jax.random.split(root, 6)

    params = init_params(k_params, input_dim, output_dim, n_neurons)
    packed = pack_params(params)
    obs = jax.random.normal(k_obs, (batch, input_dim), dtype=jnp.float32)

    # --- action=None path (reparameterized sample inside the kernel) ---------
    action, neg_log_prob, entropy, value = actor_critic_forward(
        packed, obs, action=None, sample_key=k_sample)
    jax.block_until_ready((action, neg_log_prob, entropy, value))

    eps_ref = jax.random.normal(k_sample, (batch, output_dim), dtype=jnp.float32)
    a_r, nlp_r, ent_r, val_r = _reference_forward(params, obs, action=None, eps=eps_ref)
    assert jnp.allclose(action, a_r, rtol=1e-3, atol=1e-3)
    assert jnp.allclose(neg_log_prob, nlp_r, rtol=1e-3, atol=1e-3)
    assert jnp.allclose(entropy, ent_r, rtol=1e-3, atol=1e-3)
    assert jnp.allclose(value, val_r, rtol=1e-3, atol=1e-3)

    # --- provided-action path -------------------------------------------------
    given_action = jax.random.normal(k_act, (batch, output_dim), dtype=jnp.float32)
    action2, nlp2, ent2, val2 = actor_critic_forward(packed, obs, action=given_action)
    jax.block_until_ready((action2, nlp2, ent2, val2))

    a2_r, nlp2_r, ent2_r, val2_r = _reference_forward(params, obs, action=given_action)
    assert jnp.allclose(action2, given_action, rtol=1e-6, atol=1e-6)
    assert jnp.allclose(nlp2, nlp2_r, rtol=1e-3, atol=1e-3)
    assert jnp.allclose(ent2, ent2_r, rtol=1e-3, atol=1e-3)
    assert jnp.allclose(val2, val2_r, rtol=1e-3, atol=1e-3)

    assert action.shape == (batch, output_dim)
    assert neg_log_prob.shape == (batch,)
    assert entropy.shape == (batch,)
    assert value.shape == (batch,)

    # --- larger ragged batch: exercises grid>1 ("parallel" axis) + tail pad ---
    b2 = 600
    obs2 = jax.random.normal(k_obs2, (b2, input_dim), dtype=jnp.float32)
    given2 = jax.random.normal(k_act2, (b2, output_dim), dtype=jnp.float32)
    a3, nlp3, ent3, val3 = actor_critic_forward(packed, obs2, action=given2)
    jax.block_until_ready((a3, nlp3, ent3, val3))
    a3_r, nlp3_r, ent3_r, val3_r = _reference_forward(params, obs2, action=given2)
    assert jnp.allclose(nlp3, nlp3_r, rtol=1e-3, atol=1e-3)
    assert jnp.allclose(ent3, ent3_r, rtol=1e-3, atol=1e-3)
    assert jnp.allclose(val3, val3_r, rtol=1e-3, atol=1e-3)

    print("KERNEL_OK")
</pallas_src>

<mosaic_0001>
module attributes {stable_mosaic.version = 11 : i64} {
  func.func @_policy_kernel(%arg0: i32, %arg1: memref<8x16xf32, #tpu.memory_space<vmem>>, %arg2: memref<8x6xf32, #tpu.memory_space<vmem>>, %arg3: memref<16x128xf32, #tpu.memory_space<vmem>>, %arg4: memref<128x128xf32, #tpu.memory_space<vmem>>, %arg5: memref<128x8xf32, #tpu.memory_space<vmem>>, %arg6: memref<8x128xf32, #tpu.memory_space<vmem>>, %arg7: memref<8x8xf32, #tpu.memory_space<vmem>>) attributes {dimension_semantics = [#tpu.dimension_semantics<parallel>], iteration_bounds = array<i64: 1>, scalar_prefetch = 0 : i64, scratch_operands = 0 : i64, tpu.core_type = #tpu.core_type<tc>, window_params = [{transform_indices = @transform_0, window_bounds = array<i64: 8, 16>}, {transform_indices = @transform_1, window_bounds = array<i64: 8, 6>}, {pipeline_mode = #tpu.pipeline_mode<synchronous>, transform_indices = @transform_2, window_bounds = array<i64: 16, 128>}, {pipeline_mode = #tpu.pipeline_mode<synchronous>, transform_indices = @transform_3, window_bounds = array<i64: 128, 128>}, {pipeline_mode = #tpu.pipeline_mode<synchronous>, transform_indices = @transform_4, window_bounds = array<i64: 128, 8>}, {pipeline_mode = #tpu.pipeline_mode<synchronous>, transform_indices = @transform_5, window_bounds = array<i64: 8, 128>}, {transform_indices = @transform_6, window_bounds = array<i64: 8, 8>}]} {
    %c0 = arith.constant 0 : index
    %c0_0 = arith.constant 0 : index
    %0 = vector.load %arg6[%c0, %c0_0] : memref<8x128xf32, #tpu.memory_space<vmem>>, vector<8x128xf32>
    %1 = vector.extract_strided_slice %0 {offsets = [0, 0], sizes = [1, 128], strides = [1, 1]} : vector<8x128xf32> to vector<1x128xf32>
    %2 = vector.extract_strided_slice %0 {offsets = [1, 0], sizes = [1, 128], strides = [1, 1]} : vector<8x128xf32> to vector<1x128xf32>
    %3 = vector.extract_strided_slice %0 {offsets = [2, 0], sizes = [1, 8], strides = [1, 1]} : vector<8x128xf32> to vector<1x8xf32>
    %c0_1 = arith.constant 0 : index
    %c0_2 = arith.constant 0 : index
    %4 = vector.load %arg1[%c0_1, %c0_2] : memref<8x16xf32, #tpu.memory_space<vmem>>, vector<8x16xf32>
    %c0_3 = arith.constant 0 : index
    %c0_4 = arith.constant 0 : index
    %5 = vector.load %arg3[%c0_3, %c0_4] : memref<16x128xf32, #tpu.memory_space<vmem>>, vector<16x128xf32>
    %cst = arith.constant dense<0.000000e+00> : vector<8x128xf32>
    %6 = tpu.matmul %4, %5, %cst {dimension_numbers = #tpu.dot_dimension_numbers<[1], [0], [0], [1], [0, 0, 1, 1], [], []>} : vector<8x16xf32>, vector<16x128xf32>, vector<8x128xf32> -> vector<8x128xf32>
    %7 = vector.broadcast %1 : vector<1x128xf32> to vector<8x128xf32>
    %8 = arith.addf %6, %7 : vector<8x128xf32>
    %9 = math.tanh %8 : vector<8x128xf32>
    %c0_5 = arith.constant 0 : index
    %c0_6 = arith.constant 0 : index
    %10 = vector.load %arg4[%c0_5, %c0_6] : memref<128x128xf32, #tpu.memory_space<vmem>>, vector<128x128xf32>
    %cst_7 = arith.constant dense<0.000000e+00> : vector<8x128xf32>
    %11 = tpu.matmul %9, %10, %cst_7 {dimension_numbers = #tpu.dot_dimension_numbers<[1], [0], [0], [1], [0, 0, 1, 1], [], []>} : vector<8x128xf32>, vector<128x128xf32>, vector<8x128xf32> -> vector<8x128xf32>
    %12 = vector.broadcast %2 : vector<1x128xf32> to vector<8x128xf32>
    %13 = arith.addf %11, %12 : vector<8x128xf32>
    %14 = math.tanh %13 : vector<8x128xf32>
    %c0_8 = arith.constant 0 : index
    %c0_9 = arith.constant 0 : index
    %15 = vector.load %arg5[%c0_8, %c0_9] : memref<128x8xf32, #tpu.memory_space<vmem>>, vector<128x8xf32>
    %cst_10 = arith.constant dense<0.000000e+00> : vector<8x8xf32>
    %16 = tpu.matmul %14, %15, %cst_10 {dimension_numbers = #tpu.dot_dimension_numbers<[1], [0], [0], [1], [0, 0, 1, 1], [], []>} : vector<8x128xf32>, vector<128x8xf32>, vector<8x8xf32> -> vector<8x8xf32>
    %17 = vector.broadcast %3 : vector<1x8xf32> to vector<8x8xf32>
    %18 = arith.addf %16, %17 : vector<8x8xf32>
    %19 = vector.extract_strided_slice %18 {offsets = [0, 0], sizes = [8, 6], strides = [1, 1]} : vector<8x8xf32> to vector<8x6xf32>
    %20 = vector.extract_strided_slice %18 {offsets = [0, 6], sizes = [8, 1], strides = [1, 1]} : vector<8x8xf32> to vector<8x1xf32>
    %21 = vector.extract_strided_slice %18 {offsets = [0, 7], sizes = [8, 1], strides = [1, 1]} : vector<8x8xf32> to vector<8x1xf32>
    %c0_11 = arith.constant 0 : index
    %c0_12 = arith.constant 0 : index
    %22 = vector.load %arg2[%c0_11, %c0_12] : memref<8x6xf32, #tpu.memory_space<vmem>>, vector<8x6xf32>
    %23 = vector.extract_strided_slice %0 {offsets = [3, 0], sizes = [1, 6], strides = [1, 1]} : vector<8x128xf32> to vector<1x6xf32>
    %24 = vector.broadcast %23 : vector<1x6xf32> to vector<8x6xf32>
    %25 = arith.mulf %24, %22 : vector<8x6xf32>
    %26 = arith.addf %19, %25 : vector<8x6xf32>
    %27 = arith.mulf %22, %22 : vector<8x6xf32>
    %cst_13 = arith.constant dense<0.000000e+00> : vector<8xf32>
    %28 = vector.multi_reduction <add>, %27, %cst_13 [1] : vector<8x6xf32> to vector<8xf32>
    %29 = vector.shape_cast %28 : vector<8xf32> to vector<8x1xf32>
    %cst_14 = arith.constant 5.000000e-01 : f32
    %30 = vector.broadcast %cst_14 : f32 to vector<8x1xf32>
    %31 = arith.mulf %30, %29 : vector<8x1xf32>
    %32 = arith.addf %20, %31 : vector<8x1xf32>
    %33 = tpu.concatenate %26, %32, %21 in 1 : vector<8x6xf32>, vector<8x1xf32>, vector<8x1xf32> -> vector<8x8xf32>
    %c0_15 = arith.constant 0 : index
    %c0_16 = arith.constant 0 : index
    %34 = vector.load %arg7[%c0_15, %c0_16] : memref<8x8xf32, #tpu.memory_space<vmem>>, vector<8x8xf32>
    tpu.vector_store %arg7[%c0_15, %c0_16], %33 {strides = array<i32>} : memref<8x8xf32, #tpu.memory_space<vmem>>, vector<8x8xf32>,
    return
  }
  func.func @transform_0(%arg0: i32) -> (i32, i32) {
    %c0_i32 = arith.constant 0 : i32
    %c0_i32_0 = arith.constant 0 : i32
    return %arg0, %c0_i32 : i32, i32
  }
  func.func @transform_1(%arg0: i32) -> (i32, i32) {
    %c0_i32 = arith.constant 0 : i32
    %c0_i32_0 = arith.constant 0 : i32
    return %arg0, %c0_i32 : i32, i32
  }
  func.func @transform_2(%arg0: i32) -> (i32, i32) {
    %c0_i32 = arith.constant 0 : i32
    %c0_i32_0 = arith.constant 0 : i32
    %c0_i32_1 = arith.constant 0 : i32
    return %c0_i32, %c0_i32_0 : i32, i32
  }
  func.func @transform_3(%arg0: i32) -> (i32, i32) {
    %c0_i32 = arith.constant 0 : i32
    %c0_i32_0 = arith.constant 0 : i32
    %c0_i32_1 = arith.constant 0 : i32
    return %c0_i32, %c0_i32_0 : i32, i32
  }
  func.func @transform_4(%arg0: i32) -> (i32, i32) {
    %c0_i32 = arith.constant 0 : i32
    %c0_i32_0 = arith.constant 0 : i32
    %c0_i32_1 = arith.constant 0 : i32
    return %c0_i32, %c0_i32_0 : i32, i32
  }
  func.func @transform_5(%arg0: i32) -> (i32, i32) {
    %c0_i32 = arith.constant 0 : i32
    %c0_i32_0 = arith.constant 0 : i32
    %c0_i32_1 = arith.constant 0 : i32
    return %c0_i32, %c0_i32_0 : i32, i32
  }
  func.func @transform_6(%arg0: i32) -> (i32, i32) {
    %c0_i32 = arith.constant 0 : i32
    %c0_i32_0 = arith.constant 0 : i32
    return %arg0, %c0_i32 : i32, i32
  }
}

</mosaic_0001>

<llo_original>
// kernel: tpu_custom_call.1
$region0: #{tpu_custom_call.1}
  #allocation0 [shape = 'u32[]', space=smem, size = 0x4, offset = 0x4, fixed_abs, tag = 'smem constant byte address 0x4 - core index']
  #allocation1 [shape = 'u32[144,128]{1,0:T(1,128)}', space=vmem, size = 0x12000, scoped, tag = 'internal scratch']
  %s0 = inlined_call_operand.hbm [shape: f32[8,16], index: 0, kind: input, shape index: {}]
  %s1 = inlined_call_operand.hbm [shape: f32[8,6], index: 1, kind: input, shape index: {}]
  %s2 = inlined_call_operand.vmem [shape: f32[16,128], index: 2, kind: input, shape index: {}]
  %s3 = inlined_call_operand.vmem [shape: f32[128,128], index: 3, kind: input, shape index: {}]
  %s4 = inlined_call_operand.vmem [shape: f32[128,8], index: 4, kind: input, shape index: {}]
  %s5 = inlined_call_operand.vmem [shape: f32[8,128], index: 5, kind: input, shape index: {}]
  %s6 = inlined_call_operand.hbm [shape: f32[8,8], index: 6, kind: output, shape index: {}]
  %s7 = sld [smem:[#allocation0]]
  $region42: #{tpu_custom_call.1} parent=0
    _
  %s9 = ssub.s32 1, %s7
  %s10 = scalar_select 0, %s9, %s7
  $region1: #{tpu_custom_call.1} parent=0
    #allocation2 [shape = 'u8[4096]{0}', space=vmem, size = 0x1000, scoped, tag = 'input window, operand 0, single buffered']
    #allocation3 [shape = 's32[1]{0}', space=sflag, size = 0x4, scoped, tag = 'scoped memory for tpu_custom_call.1']
    #allocation4 [shape = 's32[1]{0}', space=sflag, size = 0x4, scoped, tag = 'scoped memory for tpu_custom_call.1']
    #allocation5 [shape = 'u8[4096]{0}', space=vmem, size = 0x1000, scoped, tag = 'input window, operand 1, single buffered']
    #allocation6 [shape = 's32[1]{0}', space=sflag, size = 0x4, scoped, tag = 'scoped memory for tpu_custom_call.1']
    #allocation7 [shape = 'u8[4096]{0}', space=vmem, size = 0x1000, scoped, tag = 'output window, operand 0, single buffered']
    %11 = vsyncpa [#allocation3], 0
    %12 = vsyncpa [#allocation6], 0
    %13 = vsyncpa [#allocation4], 0
    // Predicated region
    $region2: #{tpu_custom_call.1} parent=1 // pred_check
      _
    $region3: #{tpu_custom_call.1} parent=1 // pred_check_branch
      %15 = sbr.rel (0) target = $region5
    $region4: #{tpu_custom_call.1} parent=1 // pred_region
      %s17 = ssub.s32 128, 128
      %18 = vsyncadd [#allocation3], %s17
      %s20 = sshll.u32 [#allocation2], 4
      %s21 = int_to_ptr.vmem [resolvable:$true] %s20
      %23 = dma.hbm_to_vmem [thread:$0]  %s0, 128, %s21, [#allocation3]
    $region5: #{tpu_custom_call.1} parent=1 // pred_fallthru
      _
    // Predicated region
    $region6: #{tpu_custom_call.1} parent=1 // pred_check
      _
    $region7: #{tpu_custom_call.1} parent=1 // pred_check_branch
      %25 = sbr.rel (0) target = $region9
    $region8: #{tpu_custom_call.1} parent=1 // pred_region
      %s27 = ssub.s32 128, 128
      %28 = vsyncadd [#allocation6], %s27
      %s30 = sshll.u32 [#allocation5], 4
      %s31 = int_to_ptr.vmem [resolvable:$true] %s30
      %33 = dma.hbm_to_vmem [thread:$0]  %s1, 128, %s31, [#allocation6]
    $region9: #{tpu_custom_call.1} parent=1 // pred_fallthru
      _
    // Predicated region
    $region10: #{tpu_custom_call.1} parent=1 // pred_check
      _
    $region11: #{tpu_custom_call.1} parent=1 // pred_check_branch
      %35 = sbr.rel (0) target = $region13
    $region12: #{tpu_custom_call.1} parent=1 // pred_region
      _
    $region13: #{tpu_custom_call.1} parent=1 // pred_fallthru
      _
    // Predicated region
    $region14: #{tpu_custom_call.1} parent=1 // pred_check
      _
    $region15: #{tpu_custom_call.1} parent=1 // pred_check_branch
      %37 = sbr.rel (0) target = $region17
    $region16: #{tpu_custom_call.1} parent=1 // pred_region
      _
    $region17: #{tpu_custom_call.1} parent=1 // pred_fallthru
      _
    // Predicated region
    $region18: #{tpu_custom_call.1} parent=1 // pred_check
      _
    $region19: #{tpu_custom_call.1} parent=1 // pred_check_branch
      %39 = sbr.rel (0) target = $region21
    $region20: #{tpu_custom_call.1} parent=1 // pred_region
      _
    $region21: #{tpu_custom_call.1} parent=1 // pred_fallthru
      _
    // Predicated region
    $region22: #{tpu_custom_call.1} parent=1 // pred_check
      _
    $region23: #{tpu_custom_call.1} parent=1 // pred_check_branch
      %41 = sbr.rel (0) target = $region25
    $region24: #{tpu_custom_call.1} parent=1 // pred_region
      _
    $region25: #{tpu_custom_call.1} parent=1 // pred_fallthru
      _
    // Predicated region
    $region26: #{tpu_custom_call.1} parent=1 // pred_check
      _
    $region27: #{tpu_custom_call.1} parent=1 // pred_check_branch
      %43 = sbr.rel (0) target = $region29
    $region28: #{tpu_custom_call.1} parent=1 // pred_region
      %44 = dma.done [#allocation3], 128
    $region29: #{tpu_custom_call.1} parent=1 // pred_fallthru
      _
    // Predicated region
    $region30: #{tpu_custom_call.1} parent=1 // pred_check
      _
    $region31: #{tpu_custom_call.1} parent=1 // pred_check_branch
      %46 = sbr.rel (0) target = $region33
    $region32: #{tpu_custom_call.1} parent=1 // pred_region
      %47 = dma.done [#allocation6], 128
    $region33: #{tpu_custom_call.1} parent=1 // pred_fallthru
      _
    %v48 = vld [vmem:[%s5] sm:$0xff]
    %v49 = vld [vmem:[#allocation2] sm:$0xff]
    %v50 = vld [vmem:[%s2] sm:$0xff]
    %v51 = vld [vmem:[%s2 + $0x8] sm:$0xff]
    %v52 = vlaneseq
    %v53 = vshrl.u32 %v52, 7
    %v54 = vsub.s32 0, %v53
    %v55 = vrot.slane %v48, %v54
    %vm56 = vcmask 130048
    %v58 = vsel %vm56, %v49, 0
    %60 = vmatprep.subr.mxu0 0.0
    %61 = vmatpush1.msra.mxu0 %v50
    %62 = vmatprep.subr.mxu0 0.0
    %63 = vmatpush1.msra.mxu0 %v51
    %64 = vmatprep.subr.mxu0 0.0
    %65 = vmatpush1.msra.mxu0 0.0
    %66 = vmatprep.subr.mxu0 0.0
    %67 = vmatpush1.msra.mxu0 0.0
    %68 = vmatprep.subr.mxu0 0.0
    %69 = vmatpush1.msra.mxu0 0.0
    %70 = vmatprep.subr.mxu0 0.0
    %71 = vmatpush1.msra.mxu0 0.0
    %72 = vmatprep.subr.mxu0 0.0
    %73 = vmatpush1.msra.mxu0 0.0
    %74 = vmatprep.subr.mxu0 0.0
    %75 = vmatpush1.msra.mxu0 0.0
    %76 = vmatprep.subr.mxu0 0.0
    %77 = vmatpush1.msra.mxu0 0.0
    %78 = vmatprep.subr.mxu0 0.0
    %79 = vmatpush1.msra.mxu0 0.0
    %80 = vmatprep.subr.mxu0 0.0
    %81 = vmatpush1.msra.mxu0 0.0
    %82 = vmatprep.subr.mxu0 0.0
    %83 = vmatpush1.msra.mxu0 0.0
    %84 = vmatprep.subr.mxu0 0.0
    %85 = vmatpush1.msra.mxu0 0.0
    %86 = vmatprep.subr.mxu0 0.0
    %87 = vmatpush1.msra.mxu0 0.0
    %88 = vmatprep.subr.mxu0 0.0
    %89 = vmatpush1.msra.mxu0 0.0
    %90 = vmatprep.subr.mxu0 0.0
    %91 = vmatpush1.msra.mxu0 0.0
    %92 = vmatprep.subr.mxu0 0.0
    %93 = vmatpush1.msra.mxu0 0.0
    %94 = vmatprep.subr.mxu0 0.0
    %95 = vmatpush1.msra.mxu0 0.0
    %96 = vmatprep.subr.mxu0 0.0
    %97 = vmatpush1.msra.mxu0 0.0
    %98 = vmatprep.subr.mxu0 0.0
    %99 = vmatpush1.msra.mxu0 0.0
    %100 = vmatprep.subr.mxu0 0.0
    %101 = vmatpush1.msra.mxu0 0.0
    %102 = vmatprep.subr.mxu0 0.0
    %103 = vmatpush1.msra.mxu0 0.0
    %104 = vmatprep.subr.mxu0 0.0
    %105 = vmatpush1.msra.mxu0 0.0
    %106 = vmatprep.subr.mxu0 0.0
    %107 = vmatpush1.msra.mxu0 0.0
    %108 = vmatprep.subr.mxu0 0.0
    %109 = vmatpush1.msra.mxu0 0.0
    %110 = vmatprep.subr.mxu0 0.0
    %111 = vmatpush1.msra.mxu0 0.0
    %112 = vmatprep.subr.mxu0 0.0
    %113 = vmatpush1.msra.mxu0 0.0
    %114 = vmatprep.subr.mxu0 0.0
    %115 = vmatpush1.msra.mxu0 0.0
    %116 = vmatprep.subr.mxu0 0.0
    %117 = vmatpush1.msra.mxu0 0.0
    %118 = vmatprep.subr.mxu0 0.0
    %119 = vmatpush1.msra.mxu0 0.0
    %120 = vmatprep.subr.mxu0 0.0
    %121 = vmatpush1.msra.mxu0 0.0
    %122 = vmatprep.subr.mxu0 0.0
    %123 = vmatpush1.msra.mxu0 0.0
    %124 = vmatprep.mubr.f32.mxu0 0.0
    %125 = vmatmul.mubr.f32.gmra.mrb[0].mxu0 %v58
    %v126 = vpop.f32.mrb[0].mxu0
    %v127 = vadd.f32 %v55, %v126
    %v128 = vpop.f32.mrb[0].mxu0
    %129 = vdwg.mxu0
    %v130 = vtanh.pop %v127
    %v131 = vld [vmem:[%s3] sm:$0xff]
    %v132 = vld [vmem:[%s3 + $0x8] sm:$0xff]
    %v133 = vld [vmem:[%s3 + $0x10] sm:$0xff]
    %v134 = vld [vmem:[%s3 + $0x18] sm:$0xff]
    %v135 = vld [vmem:[%s3 + $0x20] sm:$0xff]
    %v136 = vld [vmem:[%s3 + $0x28] sm:$0xff]
    %v137 = vld [vmem:[%s3 + $0x30] sm:$0xff]
    %v138 = vld [vmem:[%s3 + $0x38] sm:$0xff]
    %v139 = vld [vmem:[%s3 + $0x40] sm:$0xff]
    %v140 = vld [vmem:[%s3 + $0x48] sm:$0xff]
    %v141 = vld [vmem:[%s3 + $0x50] sm:$0xff]
    %v142 = vld [vmem:[%s3 + $0x58] sm:$0xff]
    %v143 = vld [vmem:[%s3 + $0x60] sm:$0xff]
    %v144 = vld [vmem:[%s3 + $0x68] sm:$0xff]
    %v145 = vld [vmem:[%s3 + $0x70] sm:$0xff]
    %v146 = vld [vmem:[%s3 + $0x78] sm:$0xff]
    %v147 = vlaneseq
    %v148 = vshrl.u32 %v147, 7
    %v149 = vsub.s32 1, %v148
    %v150 = vrot.slane %v48, %v149
    %151 = vmatprep.subr.mxu0 0.0
    %152 = vmatpush1.msra.mxu0 %v131
    %153 = vmatprep.subr.mxu0 0.0
    %154 = vmatpush1.msra.mxu0 %v132
    %155 = vmatprep.subr.mxu0 0.0
    %156 = vmatpush1.msra.mxu0 %v133
    %157 = vmatprep.subr.mxu0 0.0
    %158 = vmatpush1.msra.mxu0 %v134
    %159 = vmatprep.subr.mxu0 0.0
    %160 = vmatpush1.msra.mxu0 %v135
    %161 = vmatprep.subr.mxu0 0.0
    %162 = vmatpush1.msra.mxu0 %v136
    %163 = vmatprep.subr.mxu0 0.0
    %164 = vmatpush1.msra.mxu0 %v137
    %165 = vmatprep.subr.mxu0 0.0
    %166 = vmatpush1.msra.mxu0 %v138
    %167 = vmatprep.subr.mxu0 0.0
    %168 = vmatpush1.msra.mxu0 %v139
    %169 = vmatprep.subr.mxu0 0.0
    %170 = vmatpush1.msra.mxu0 %v140
    %171 = vmatprep.subr.mxu0 0.0
    %172 = vmatpush1.msra.mxu0 %v141
    %173 = vmatprep.subr.mxu0 0.0
    %174 = vmatpush1.msra.mxu0 %v142
    %175 = vmatprep.subr.mxu0 0.0
    %176 = vmatpush1.msra.mxu0 %v143
    %177 = vmatprep.subr.mxu0 0.0
    %178 = vmatpush1.msra.mxu0 %v144
    %179 = vmatprep.subr.mxu0 0.0
    %180 = vmatpush1.msra.mxu0 %v145
    %181 = vmatprep.subr.mxu0 0.0
    %182 = vmatpush1.msra.mxu0 %v146
    %183 = vmatprep.subr.mxu0 0.0
    %184 = vmatpush1.msra.mxu0 0.0
    %185 = vmatprep.subr.mxu0 0.0
    %186 = vmatpush1.msra.mxu0 0.0
    %187 = vmatprep.subr.mxu0 0.0
    %188 = vmatpush1.msra.mxu0 0.0
    %189 = vmatprep.subr.mxu0 0.0
    %190 = vmatpush1.msra.mxu0 0.0
    %191 = vmatprep.subr.mxu0 0.0
    %192 = vmatpush1.msra.mxu0 0.0
    %193 = vmatprep.subr.mxu0 0.0
    %194 = vmatpush1.msra.mxu0 0.0
    %195 = vmatprep.subr.mxu0 0.0
    %196 = vmatpush1.msra.mxu0 0.0
    %197 = vmatprep.subr.mxu0 0.0
    %198 = vmatpush1.msra.mxu0 0.0
    %199 = vmatprep.subr.mxu0 0.0
    %200 = vmatpush1.msra.mxu0 0.0
    %201 = vmatprep.subr.mxu0 0.0
    %202 = vmatpush1.msra.mxu0 0.0
    %203 = vmatprep.subr.mxu0 0.0
    %204 = vmatpush1.msra.mxu0 0.0
    %205 = vmatprep.subr.mxu0 0.0
    %206 = vmatpush1.msra.mxu0 0.0
    %207 = vmatprep.subr.mxu0 0.0
    %208 = vmatpush1.msra.mxu0 0.0
    %209 = vmatprep.subr.mxu0 0.0
    %210 = vmatpush1.msra.mxu0 0.0
    %211 = vmatprep.subr.mxu0 0.0
    %212 = vmatpush1.msra.mxu0 0.0
    %213 = vmatprep.subr.mxu0 0.0
    %214 = vmatpush1.msra.mxu0 0.0
    %215 = vmatprep.mubr.f32.mxu0 0.0
    %216 = vmatmul.mubr.f32.gmra.mrb[0].mxu0 %v130
    %v217 = vpop.f32.mrb[0].mxu0
    %v218 = vadd.f32 %v150, %v217
    %v219 = vpop.f32.mrb[0].mxu0
    %220 = vdwg.mxu0
    %v221 = vtanh.pop %v218
    %v222 = vld [vmem:[%s4] sm:$0xff]
    %v223 = vld [vmem:[%s4 + $0x8] sm:$0xff]
    %v224 = vld [vmem:[%s4 + $0x10] sm:$0xff]
    %v225 = vld [vmem:[%s4 + $0x18] sm:$0xff]
    %v226 = vld [vmem:[%s4 + $0x20] sm:$0xff]
    %v227 = vld [vmem:[%s4 + $0x28] sm:$0xff]
    %v228 = vld [vmem:[%s4 + $0x30] sm:$0xff]
    %v229 = vld [vmem:[%s4 + $0x38] sm:$0xff]
    %v230 = vld [vmem:[%s4 + $0x40] sm:$0xff]
    %v231 = vld [vmem:[%s4 + $0x48] sm:$0xff]
    %v232 = vld [vmem:[%s4 + $0x50] sm:$0xff]
    %v233 = vld [vmem:[%s4 + $0x58] sm:$0xff]
    %v234 = vld [vmem:[%s4 + $0x60] sm:$0xff]
    %v235 = vld [vmem:[%s4 + $0x68] sm:$0xff]
    %v236 = vld [vmem:[%s4 + $0x70] sm:$0xff]
    %v237 = vld [vmem:[%s4 + $0x78] sm:$0xff]
    %v238 = vlaneseq
    %v239 = vshrl.u32 %v238, 7
    %v240 = vsub.s32 2, %v239
    %v241 = vrot.slane %v48, %v240
    %242 = vmatprep.subr.mxu0 0.0
    %243 = vmatpush1.msra.mxu0 %v222
    %244 = vmatprep.subr.mxu0 0.0
    %245 = vmatpush1.msra.mxu0 %v223
    %246 = vmatprep.subr.mxu0 0.0
    %247 = vmatpush1.msra.mxu0 %v224
    %248 = vmatprep.subr.mxu0 0.0
    %249 = vmatpush1.msra.mxu0 %v225
    %250 = vmatprep.subr.mxu0 0.0
    %251 = vmatpush1.msra.mxu0 %v226
    %252 = vmatprep.subr.mxu0 0.0
    %253 = vmatpush1.msra.mxu0 %v227
    %254 = vmatprep.subr.mxu0 0.0
    %255 = vmatpush1.msra.mxu0 %v228
    %256 = vmatprep.subr.mxu0 0.0
    %257 = vmatpush1.msra.mxu0 %v229
    %258 = vmatprep.subr.mxu0 0.0
    %259 = vmatpush1.msra.mxu0 %v230
    %260 = vmatprep.subr.mxu0 0.0
    %261 = vmatpush1.msra.mxu0 %v231
    %262 = vmatprep.subr.mxu0 0.0
    %263 = vmatpush1.msra.mxu0 %v232
    %264 = vmatprep.subr.mxu0 0.0
    %265 = vmatpush1.msra.mxu0 %v233
    %266 = vmatprep.subr.mxu0 0.0
    %267 = vmatpush1.msra.mxu0 %v234
    %268 = vmatprep.subr.mxu0 0.0
    %269 = vmatpush1.msra.mxu0 %v235
    %270 = vmatprep.subr.mxu0 0.0
    %271 = vmatpush1.msra.mxu0 %v236
    %272 = vmatprep.subr.mxu0 0.0
    %273 = vmatpush1.msra.mxu0 %v237
    %274 = vmatprep.subr.mxu0 0.0
    %275 = vmatpush1.msra.mxu0 0.0
    %276 = vmatprep.subr.mxu0 0.0
    %277 = vmatpush1.msra.mxu0 0.0
    %278 = vmatprep.subr.mxu0 0.0
    %279 = vmatpush1.msra.mxu0 0.0
    %280 = vmatprep.subr.mxu0 0.0
    %281 = vmatpush1.msra.mxu0 0.0
    %282 = vmatprep.subr.mxu0 0.0
    %283 = vmatpush1.msra.mxu0 0.0
    %284 = vmatprep.subr.mxu0 0.0
    %285 = vmatpush1.msra.mxu0 0.0
    %286 = vmatprep.subr.mxu0 0.0
    %287 = vmatpush1.msra.mxu0 0.0
    %288 = vmatprep.subr.mxu0 0.0
    %289 = vmatpush1.msra.mxu0 0.0
    %290 = vmatprep.subr.mxu0 0.0
    %291 = vmatpush1.msra.mxu0 0.0
    %292 = vmatprep.subr.mxu0 0.0
    %293 = vmatpush1.msra.mxu0 0.0
    %294 = vmatprep.subr.mxu0 0.0
    %295 = vmatpush1.msra.mxu0 0.0
    %296 = vmatprep.subr.mxu0 0.0
    %297 = vmatpush1.msra.mxu0 0.0
    %298 = vmatprep.subr.mxu0 0.0
    %299 = vmatpush1.msra.mxu0 0.0
    %300 = vmatprep.subr.mxu0 0.0
    %301 = vmatpush1.msra.mxu0 0.0
    %302 = vmatprep.subr.mxu0 0.0
    %303 = vmatpush1.msra.mxu0 0.0
    %304 = vmatprep.subr.mxu0 0.0
    %305 = vmatpush1.msra.mxu0 0.0
    %306 = vmatprep.mubr.f32.mxu0 0.0
    %307 = vmatmul.mubr.f32.gmra.mrb[0].mxu0 %v221
    %v308 = vpop.f32.mrb[0].mxu0
    %v309 = vadd.f32 %v241, %v308
    %v310 = vpop.f32.mrb[0].mxu0
    %311 = vdwg.mxu0
    %v312 = vld [vmem:[#allocation5] sm:$0xff]
    %v313 = vlaneseq
    %v314 = vshrl.u32 %v313, 7
    %v315 = vsub.s32 3, %v314
    %v316 = vrot.slane %v48, %v315
    %v317 = vmul.f32 %v316, %v312
    %v318 = vadd.f32 %v309, %v317
    %v319 = vmul.f32 %v312, %v312
    %vm320 = vcmask 48128
    %v321 = vsel %vm320, %v319, 0.0
    %322 = vadd.xlane.f32.xlu0 %v321
    %v323 = vpop.xlane.xlu0 %322
    %v324 = vmul.f32 %v323, 0.5
    %v325 = vadd.f32 %v309, %v324
    %v326 = vsel %vm320, %v318, %v325
    %vm327 = vcmask 56320
    %v328 = vsel %vm327, %v326, %v309
    %vm329 = vcmask 64512
    %330 = vst.msk [vmem:[#allocation7] sm:$0xff] %vm329, %v328
    // Predicated region
    $region34: #{tpu_custom_call.1} parent=1 // pred_check
      _
    $region35: #{tpu_custom_call.1} parent=1 // pred_check_branch
      %332 = sbr.rel (0) target = $region37
    $region36: #{tpu_custom_call.1} parent=1 // pred_region
      %s334 = ssub.s32 128, 128
      %335 = vsyncadd [#allocation4], %s334
      %s337 = sshll.u32 [#allocation7], 4
      %s338 = int_to_ptr.vmem [resolvable:$true] %s337
      %340 = dma.vmem_to_hbm [thread:$0]  %s338, 128, %s6, [#allocation4]
    $region37: #{tpu_custom_call.1} parent=1 // pred_fallthru
      _
    // Predicated region
    $region38: #{tpu_custom_call.1} parent=1 // pred_check
      _
    $region39: #{tpu_custom_call.1} parent=1 // pred_check_branch
      %342 = sbr.rel (0) target = $region41
    $region40: #{tpu_custom_call.1} parent=1 // pred_region
      %343 = dma.done [#allocation4], 128
    $region41: #{tpu_custom_call.1} parent=1 // pred_fallthru
      _
    %344 = vsyncpa [#allocation3], 1
    %345 = vsyncpa [#allocation6], 1
    %346 = vsyncpa [#allocation4], 1

</llo_original>
